<compile_context>
chip_gen: v7x
topology: tpu7x:2x2x1
jax: 0.10.0
libtpu: 0.0.40
codegen_flags: <defaults>
</compile_context>

<pallas_src>
import itertools

import jax
import jax.numpy as jnp
from jax.experimental import pallas as pl
from jax.experimental.pallas import tpu as pltpu

TM_MAX = 1024                      # max active-voxel rows per grid step
COMPUTE_DTYPE = jnp.bfloat16       # operand + feature storage dtype (f32 acc)
VMEM_LIMIT_BYTES = 32 * 1024 * 1024


def _round_up(x, m):
    return ((x + m - 1) // m) * m


def _plan_rows(m):
    """Row capacity + row tile.

    Tile is a multiple of 128 (clean MXU / (8,128) layouts), capacity is a
    multiple of the tile (pads become no-ops), and we prefer >= 2 grid steps
    when the capacity allows so both v7x TensorCores get work."""
    m = max(int(m), 1)
    tm = min(TM_MAX, _round_up(m, 128))
    if tm >= 256 and _round_up(m, tm) == tm:      # would be a single grid step
        tm = max(128, _round_up(tm // 2, 128))
    mp = _round_up(m, tm)
    return mp, tm


# ----------------------------------------------------------------------------
# Pallas kernel: fused matmul (MXU) + bias (BN folded) + ReLU + row masking
# ----------------------------------------------------------------------------
def _gemm_bias_relu_kernel(p_ref, w_ref, b_ref, v_ref, o_ref):
    # p_ref: (TM, Kp) bf16  gathered neighbor features for TM output voxels
    # w_ref: (Kp, Cout) bf16 conv weights with BN scale folded in (zero-padded K)
    # b_ref: (1, Cout) f32  BN bias (= beta - mean * scale)
    # v_ref: (TM, 1)  f32   1.0 for real active rows, 0.0 for padded/invalid
    acc = jnp.dot(p_ref[...], w_ref[...], preferred_element_type=jnp.float32)
    y = jnp.maximum(acc + b_ref[...], 0.0) * v_ref[...]
    o_ref[...] = y.astype(o_ref.dtype)


def fused_gemm_bias_relu(patches, w, bias, valid):
    """patches: (M, Kp) bf16, w: (Kp, Cout) bf16, bias: (Cout,) f32, valid: (M,).

    Returns (Mp, Cout) bf16 with Mp = planned capacity; padded/invalid rows are
    exactly zero.  For pre-planned capacities Mp == M and no pad happens."""
    M, K = patches.shape
    Cout = w.shape[1]
    Mp, tm = _plan_rows(M)
    if Mp != M:                                    # no-op for planned capacities
        patches = jnp.pad(patches, ((0, Mp - M), (0, 0)))
        valid = jnp.pad(valid, (0, Mp - M))
    v = valid.astype(jnp.float32).reshape(Mp, 1)
    b2 = bias.reshape(1, Cout).astype(jnp.float32)

    isz = jnp.dtype(COMPUTE_DTYPE).itemsize
    cost = pl.CostEstimate(
        flops=2 * Mp * K * Cout,
        transcendentals=0,
        bytes_accessed=Mp * K * isz + K * Cout * isz + Mp * Cout * isz + Mp * 4)

    return pl.pallas_call(
        _gemm_bias_relu_kernel,
        out_shape=jax.ShapeDtypeStruct((Mp, Cout), COMPUTE_DTYPE),
        grid_spec=pl.GridSpec(
            grid=(Mp // tm,),
            in_specs=[
                pl.BlockSpec((tm, K), lambda i: (i, 0)),
                pl.BlockSpec((K, Cout), lambda i: (0, 0)),
                pl.BlockSpec((1, Cout), lambda i: (0, 0)),
                pl.BlockSpec((tm, 1), lambda i: (i, 0)),
            ],
            out_specs=pl.BlockSpec((tm, Cout), lambda i: (i, 0)),
        ),
        compiler_params=pltpu.CompilerParams(
            dimension_semantics=("parallel",),
            vmem_limit_bytes=VMEM_LIMIT_BYTES),
        cost_estimate=cost,
    )(patches, w, b2, v)


# ----------------------------------------------------------------------------
# Sparse-tensor glue (rulebook gathers / scatters) — plain JAX
# ----------------------------------------------------------------------------
def make_sparse_tensor(features, indices, valid, spatial_shape, batch_size,
                       n_bound):
    return {"features": features, "indices": indices, "valid": valid,
            "spatial_shape": tuple(int(s) for s in spatial_shape),
            "batch_size": int(batch_size), "n_bound": int(n_bound)}


def _index_grid(st):
    """Dense (B, D, H, W) int32 grid holding the active row index, else -1.

    Built once per stage and reused by every layer sharing that active set
    (spconv indice_key semantics)."""
    B = st["batch_size"]
    D, H, W = st["spatial_shape"]
    idx = st["indices"]
    n = idx.shape[0]
    b = jnp.where(st["valid"], idx[:, 0], B)      # invalid rows -> OOB, dropped
    grid = jnp.full((B, D, H, W), -1, jnp.int32)
    return grid.at[b, idx[:, 1], idx[:, 2], idx[:, 3]].set(
        jnp.arange(n, dtype=jnp.int32), mode="drop")


def _kernel_offsets(ksize):
    return jnp.asarray(list(itertools.product(*(range(k) for k in ksize))),
                       dtype=jnp.int32)           # (T, 3)


def _gather_patches(in_st, grid_idx, out_indices, out_valid,
                    ksize, stride, padding, k_padded):
    """(M, k_padded) bf16 im2col for every output row — one fused gather."""
    feats = in_st["features"]
    n_in, cin = feats.shape
    feats_ext = jnp.concatenate([feats, jnp.zeros((1, cin), feats.dtype)], 0)
    offs = _kernel_offsets(ksize)
    B, D, H, W = grid_idx.shape
    z = out_indices[:, 1:2] * stride[0] - padding[0] + offs[None, :, 0]
    y = out_indices[:, 2:3] * stride[1] - padding[1] + offs[None, :, 1]
    x = out_indices[:, 3:4] * stride[2] - padding[2] + offs[None, :, 2]
    inb = ((z >= 0) & (z < D) & (y >= 0) & (y < H) & (x >= 0) & (x < W)
           & out_valid[:, None])
    r = grid_idx[jnp.clip(out_indices[:, 0:1], 0, B - 1),
                 jnp.clip(z, 0, D - 1), jnp.clip(y, 0, H - 1),
                 jnp.clip(x, 0, W - 1)]
    r = jnp.where(inb & (r >= 0), r, n_in)        # inactive neighbor -> zero row
    g = jnp.take(feats_ext, r.reshape(-1), axis=0)
    g = g.reshape(out_indices.shape[0], offs.shape[0] * cin)
    K = g.shape[1]
    if k_padded > K:                              # lane-align K to 128
        g = jnp.pad(g, ((0, 0), (0, k_padded - K)))
    return g


def _downsample_indices(in_st, ksize, stride, padding, out_shape, capacity):
    """Active output coords of a strided SparseConv3d (union of touched sites)."""
    B = in_st["batch_size"]
    Do, Ho, Wo = out_shape
    idx = in_st["indices"]
    offs = _kernel_offsets(ksize)
    nz = idx[:, 1:2] + padding[0] - offs[None, :, 0]
    ny = idx[:, 2:3] + padding[1] - offs[None, :, 1]
    nx = idx[:, 3:4] + padding[2] - offs[None, :, 2]
    zo, yo, xo = nz // stride[0], ny // stride[1], nx // stride[2]
    ok = ((nz >= 0) & (nz % stride[0] == 0) & (zo < Do) &
          (ny >= 0) & (ny % stride[1] == 0) & (yo < Ho) &
          (nx >= 0) & (nx % stride[2] == 0) & (xo < Wo) &
          in_st["valid"][:, None])
    b = jnp.where(ok, idx[:, 0:1], B)             # invalid taps -> OOB, dropped
    occ = jnp.zeros((B, Do, Ho, Wo), jnp.int32)
    occ = occ.at[b.reshape(-1),
                 jnp.clip(zo, 0, Do - 1).reshape(-1),
                 jnp.clip(yo, 0, Ho - 1).reshape(-1),
                 jnp.clip(xo, 0, Wo - 1).reshape(-1)].set(1, mode="drop")
    count = jnp.sum(occ)
    bs, zs, ys, xs = jnp.nonzero(occ, size=capacity, fill_value=0)
    out_idx = jnp.stack([bs, zs, ys, xs], axis=1).astype(jnp.int32)
    out_valid = jnp.arange(capacity, dtype=jnp.int32) < count
    return out_idx, out_valid


def sparse_conv_block(in_st, params, ksize, stride, padding, subm, grid_idx):
    """One (SubM/Sparse)Conv3d + BN(eval affine) + ReLU block.

    `grid_idx` is the (reused) coord->row index grid of the INPUT active set."""
    if subm:
        out_shape = in_st["spatial_shape"]
        out_idx, out_valid = in_st["indices"], in_st["valid"]
        n_bound = in_st["n_bound"]
    else:
        out_shape = tuple((d + 2 * p - k) // s + 1 for d, k, s, p in
                          zip(in_st["spatial_shape"], ksize, stride, padding))
        dense_out = (in_st["batch_size"] * out_shape[0] * out_shape[1]
                     * out_shape[2])
        per_in = 1
        for k, s in zip(ksize, stride):
            per_in *= -(-k // s)                  # ceil(k / s) outputs per input/dim
        # TODO(synk): exact worst-case capacity; can be tightened (~2x valid
        # count) once a runtime overflow check on `count` is added.
        n_bound = min(dense_out, in_st["n_bound"] * per_in)
        capacity, _ = _plan_rows(n_bound)         # multiple of the row tile
        out_idx, out_valid = _downsample_indices(
            in_st, ksize, stride, padding, out_shape, capacity)

    patches = _gather_patches(in_st, grid_idx, out_idx, out_valid,
                              ksize, stride, padding, params["w"].shape[0])
    feats = fused_gemm_bias_relu(patches, params["w"], params["bias"], out_valid)

    mp, m = feats.shape[0], out_idx.shape[0]
    if mp > m:                                    # defensive; no-op when planned
        out_idx = jnp.pad(out_idx, ((0, mp - m), (0, 0)))
        out_valid = jnp.pad(out_valid, (0, mp - m))
    return make_sparse_tensor(feats, out_idx, out_valid, out_shape,
                              in_st["batch_size"], n_bound)


def sparse_to_dense(st):
    B = st["batch_size"]
    D, H, W = st["spatial_shape"]
    feats = st["features"]
    idx = st["indices"]
    dense = jnp.zeros((B, D, H, W, feats.shape[1]), feats.dtype)
    b = jnp.where(st["valid"], idx[:, 0], B)      # invalid rows dropped
    return dense.at[b, idx[:, 1], idx[:, 2], idx[:, 3]].set(feats, mode="drop")


# ----------------------------------------------------------------------------
# Parameter construction (deterministic, synthetic; BN folded into weights)
# ----------------------------------------------------------------------------
def make_block_params(key, cin, cout, ksize, eps=1e-3):
    taps = ksize[0] * ksize[1] * ksize[2]
    K = taps * cin
    Kp = _round_up(K, 128)                        # lane-aligned K, zero rows
    kw_, kg, kb, km, kv = jax.random.split(key, 5)
    w = jax.random.normal(kw_, (K, cout), jnp.float32) * 0.05
    gamma = 1.0 + 0.01 * jax.random.normal(kg, (cout,), jnp.float32)
    beta = 0.01 * jax.random.normal(kb, (cout,), jnp.float32)
    mean = 0.01 * jax.random.normal(km, (cout,), jnp.float32)
    var = jnp.abs(1.0 + 0.01 * jax.random.normal(kv, (cout,), jnp.float32))
    scale = gamma / jnp.sqrt(var + eps)
    w_folded = jnp.zeros((Kp, cout), jnp.float32).at[:K].set(w * scale[None, :])
    return {"w": w_folded.astype(COMPUTE_DTYPE), "bias": beta - mean * scale}


def build_params(key, input_channels):
    cfgs = [
        ("conv_input", input_channels, 16, (3, 3, 3)),
        ("conv1_0",    16, 16, (3, 3, 3)),
        ("conv2_0",    16, 32, (3, 3, 3)),
        ("conv2_1",    32, 32, (3, 3, 3)),
        ("conv2_2",    32, 32, (3, 3, 3)),
        ("conv3_0",    32, 64, (3, 3, 3)),
        ("conv3_1",    64, 64, (3, 3, 3)),
        ("conv3_2",    64, 64, (3, 3, 3)),
        ("conv4_0",    64, 64, (3, 3, 3)),
        ("conv4_1",    64, 64, (3, 3, 3)),
        ("conv4_2",    64, 64, (3, 3, 3)),
        ("conv_out",   64, 128, (3, 1, 1)),
    ]
    keys = jax.random.split(key, len(cfgs))
    return {name: make_block_params(k, ci, co, ks)
            for k, (name, ci, co, ks) in zip(keys, cfgs)}


# ----------------------------------------------------------------------------
# VoxelBackBone8x forward (sparse gather-GEMM-scatter equivalent)
# ----------------------------------------------------------------------------
def voxel_backbone_8x_forward(batch_dict, params, sparse_shape):
    vf = batch_dict["voxel_features"]
    vc = batch_dict["voxel_coords"].astype(jnp.int32)
    bs = batch_dict["batch_size"]
    n, cin = vf.shape

    # Pad the input active set to its planned row capacity once; everything
    # downstream keeps row counts as multiples of the layer's row tile.
    mp0, _ = _plan_rows(n)
    feats = jnp.zeros((mp0, cin), COMPUTE_DTYPE).at[:n].set(
        vf.astype(COMPUTE_DTYPE))
    idx = jnp.zeros((mp0, 4), jnp.int32).at[:n].set(vc)
    valid = jnp.arange(mp0, dtype=jnp.int32) < n
    st = make_sparse_tensor(feats, idx, valid, sparse_shape, bs, n)

    blk = sparse_conv_block
    # Stage 1 ('subm1' rulebook): conv_input, conv1, and the spconv2 gather
    # all read the stride-1 active set -> one shared index grid.
    g1 = _index_grid(st)
    x = blk(st, params["conv_input"], (3, 3, 3), (1, 1, 1), (1, 1, 1), True, g1)
    x1 = blk(x, params["conv1_0"], (3, 3, 3), (1, 1, 1), (1, 1, 1), True, g1)
    x2 = blk(x1, params["conv2_0"], (3, 3, 3), (2, 2, 2), (1, 1, 1), False, g1)
    # Stage 2 ('subm2')
    g2 = _index_grid(x2)
    x2 = blk(x2, params["conv2_1"], (3, 3, 3), (1, 1, 1), (1, 1, 1), True, g2)
    x2 = blk(x2, params["conv2_2"], (3, 3, 3), (1, 1, 1), (1, 1, 1), True, g2)
    x3 = blk(x2, params["conv3_0"], (3, 3, 3), (2, 2, 2), (1, 1, 1), False, g2)
    # Stage 3 ('subm3')
    g3 = _index_grid(x3)
    x3 = blk(x3, params["conv3_1"], (3, 3, 3), (1, 1, 1), (1, 1, 1), True, g3)
    x3 = blk(x3, params["conv3_2"], (3, 3, 3), (1, 1, 1), (1, 1, 1), True, g3)
    x4 = blk(x3, params["conv4_0"], (3, 3, 3), (2, 2, 2), (0, 1, 1), False, g3)
    # Stage 4 ('subm4')
    g4 = _index_grid(x4)
    x4 = blk(x4, params["conv4_1"], (3, 3, 3), (1, 1, 1), (1, 1, 1), True, g4)
    x4 = blk(x4, params["conv4_2"], (3, 3, 3), (1, 1, 1), (1, 1, 1), True, g4)
    # conv_out: SparseConv3d(64, 128, (3,1,1), stride (2,1,1), pad 0)
    out = blk(x4, params["conv_out"], (3, 1, 1), (2, 1, 1), (0, 0, 0), False, g4)

    batch_dict.update({
        "encoded_spconv_tensor": out,
        "encoded_spconv_tensor_stride": 8,
        "multi_scale_3d_features": {
            "x_conv1": x1, "x_conv2": x2, "x_conv3": x3, "x_conv4": x4,
        },
        "multi_scale_3d_strides": {"x_conv1": 1, "x_conv2": 2,
                                   "x_conv3": 4, "x_conv4": 8},
    })
    return batch_dict


# ----------------------------------------------------------------------------
if __name__ == "__main__":
    key = jax.random.PRNGKey(0)
    k_feat, k_coord, k_param = jax.random.split(key, 3)

    # Small but valid shapes: grid_size = [x=16, y=16, z=24]
    # -> sparse_shape = grid_size[::-1] + [1,0,0] = [25, 16, 16]  (z, y, x)
    grid_size = [16, 16, 24]
    sparse_shape = (grid_size[2] + 1, grid_size[1], grid_size[0])  # (25,16,16)

    batch_size = 2
    num_voxels = 300
    input_channels = 4

    voxel_features = jax.random.normal(
        k_feat, (num_voxels, input_channels), jnp.float32)
    kb, kz, ky, kx = jax.random.split(k_coord, 4)
    voxel_coords = jnp.stack([
        jax.random.randint(kb, (num_voxels,), 0, batch_size),
        jax.random.randint(kz, (num_voxels,), 0, grid_size[2]),
        jax.random.randint(ky, (num_voxels,), 0, grid_size[1]),
        jax.random.randint(kx, (num_voxels,), 0, grid_size[0]),
    ], axis=1).astype(jnp.int32)

    params = build_params(k_param, input_channels)

    batch_dict = {
        "batch_size": batch_size,
        "voxel_features": voxel_features,
        "voxel_coords": voxel_coords,
    }

    out_dict = voxel_backbone_8x_forward(batch_dict, params, sparse_shape)
    enc = out_dict["encoded_spconv_tensor"]
    enc_dense = sparse_to_dense(enc)
    jax.block_until_ready(enc_dense)

    assert enc_dense.shape == (batch_size, 1, 2, 2, 128), enc_dense.shape
    ms = out_dict["multi_scale_3d_features"]
    assert ms["x_conv1"]["features"].shape[1] == 16
    assert ms["x_conv2"]["features"].shape[1] == 32
    assert ms["x_conv3"]["features"].shape[1] == 64
    assert ms["x_conv4"]["features"].shape[1] == 64
    assert ms["x_conv1"]["spatial_shape"] == (25, 16, 16)
    assert enc["spatial_shape"] == (1, 2, 2)
    assert bool(jnp.all(jnp.isfinite(enc_dense.astype(jnp.float32))))
    print("KERNEL_OK")
</pallas_src>

<mosaic_0001>
module attributes {stable_mosaic.version = 11 : i64} {
  func.func @_gemm_bias_relu_kernel(%arg0: i32, %arg1: memref<256x128xbf16, #tpu.memory_space<vmem>>, %arg2: memref<128x16xbf16, #tpu.memory_space<vmem>>, %arg3: memref<1x16xf32, #tpu.memory_space<vmem>>, %arg4: memref<256x1xf32, #tpu.memory_space<vmem>>, %arg5: memref<256x16xbf16, #tpu.memory_space<vmem>>) attributes {dimension_semantics = [#tpu.dimension_semantics<parallel>], iteration_bounds = array<i64: 2>, scalar_prefetch = 0 : i64, scratch_operands = 0 : i64, tpu.core_type = #tpu.core_type<tc>, window_params = [{transform_indices = @transform_0, window_bounds = array<i64: 256, 128>}, {pipeline_mode = #tpu.pipeline_mode<synchronous>, transform_indices = @transform_1, window_bounds = array<i64: 128, 16>}, {pipeline_mode = #tpu.pipeline_mode<synchronous>, transform_indices = @transform_2, window_bounds = array<i64: 1, 16>}, {transform_indices = @transform_3, window_bounds = array<i64: 256, 1>}, {transform_indices = @transform_4, window_bounds = array<i64: 256, 16>}]} {
    %c0 = arith.constant 0 : index
    %c0_0 = arith.constant 0 : index
    %0 = vector.load %arg1[%c0, %c0_0] : memref<256x128xbf16, #tpu.memory_space<vmem>>, vector<256x128xbf16>
    %c0_1 = arith.constant 0 : index
    %c0_2 = arith.constant 0 : index
    %1 = vector.load %arg2[%c0_1, %c0_2] : memref<128x16xbf16, #tpu.memory_space<vmem>>, vector<128x16xbf16>
    %cst = arith.constant dense<0.000000e+00> : vector<256x16xf32>
    %2 = tpu.matmul %0, %1, %cst {dimension_numbers = #tpu.dot_dimension_numbers<[1], [0], [0], [1], [0, 0, 1, 1], [], []>} : vector<256x128xbf16>, vector<128x16xbf16>, vector<256x16xf32> -> vector<256x16xf32>
    %c0_3 = arith.constant 0 : index
    %c0_4 = arith.constant 0 : index
    %3 = vector.load %arg3[%c0_3, %c0_4] : memref<1x16xf32, #tpu.memory_space<vmem>>, vector<1x16xf32>
    %4 = vector.broadcast %3 : vector<1x16xf32> to vector<256x16xf32>
    %5 = arith.addf %2, %4 : vector<256x16xf32>
    %cst_5 = arith.constant 0.000000e+00 : f32
    %6 = vector.broadcast %cst_5 : f32 to vector<256x16xf32>
    %7 = arith.maximumf %5, %6 : vector<256x16xf32>
    %c0_6 = arith.constant 0 : index
    %c0_7 = arith.constant 0 : index
    %8 = vector.load %arg4[%c0_6, %c0_7] : memref<256x1xf32, #tpu.memory_space<vmem>>, vector<256x1xf32>
    %9 = vector.broadcast %8 : vector<256x1xf32> to vector<256x16xf32>
    %10 = arith.mulf %7, %9 : vector<256x16xf32>
    %11 = arith.truncf %10 : vector<256x16xf32> to vector<256x16xbf16>
    %c0_8 = arith.constant 0 : index
    %c0_9 = arith.constant 0 : index
    %12 = vector.load %arg5[%c0_8, %c0_9] : memref<256x16xbf16, #tpu.memory_space<vmem>>, vector<256x16xbf16>
    tpu.vector_store %arg5[%c0_8, %c0_9], %11 {strides = array<i32>} : memref<256x16xbf16, #tpu.memory_space<vmem>>, vector<256x16xbf16>,
    return
  }
  func.func @transform_0(%arg0: i32) -> (i32, i32) {
    %c0_i32 = arith.constant 0 : i32
    %c0_i32_0 = arith.constant 0 : i32
    return %arg0, %c0_i32 : i32, i32
  }
  func.func @transform_1(%arg0: i32) -> (i32, i32) {
    %c0_i32 = arith.constant 0 : i32
    %c0_i32_0 = arith.constant 0 : i32
    %c0_i32_1 = arith.constant 0 : i32
    return %c0_i32, %c0_i32_0 : i32, i32
  }
  func.func @transform_2(%arg0: i32) -> (i32, i32) {
    %c0_i32 = arith.constant 0 : i32
    %c0_i32_0 = arith.constant 0 : i32
    %c0_i32_1 = arith.constant 0 : i32
    return %c0_i32, %c0_i32_0 : i32, i32
  }
  func.func @transform_3(%arg0: i32) -> (i32, i32) {
    %c0_i32 = arith.constant 0 : i32
    %c0_i32_0 = arith.constant 0 : i32
    return %arg0, %c0_i32 : i32, i32
  }
  func.func @transform_4(%arg0: i32) -> (i32, i32) {
    %c0_i32 = arith.constant 0 : i32
    %c0_i32_0 = arith.constant 0 : i32
    return %arg0, %c0_i32 : i32, i32
  }
}

</mosaic_0001>

<llo_original>
// kernel: tpu_custom_call.1
$region0: #{tpu_custom_call.1}
  #allocation0 [shape = 'u32[]', space=smem, size = 0x4, offset = 0x4, fixed_abs, tag = 'smem constant byte address 0x4 - core index']
  #allocation1 [shape = 'u32[144,128]{1,0:T(1,128)}', space=vmem, size = 0x12000, scoped, tag = 'internal scratch']
  %s0 = inlined_call_operand.vmem [shape: bf16[512,128], index: 0, kind: input, shape index: {}]
  %s1 = inlined_call_operand.vmem [shape: bf16[128,16], index: 1, kind: input, shape index: {}]
  %s2 = inlined_call_operand.vmem [shape: f32[1,16], index: 2, kind: input, shape index: {}]
  %s3 = inlined_call_operand.vmem [shape: f32[512,1], index: 3, kind: input, shape index: {}]
  %s4 = inlined_call_operand.vmem [shape: bf16[512,16], index: 4, kind: output, shape index: {}]
  %s5 = sld [smem:[#allocation0]]
  $region49: #{tpu_custom_call.1} parent=0
    _
  %s7 = ssub.s32 1, %s5
  %s8 = scalar_select 0, %s7, %s5
  loop: start=0, step=1, limit=4
  $region2: #{tpu_custom_call.1} parent=0 // loop_pre_header
    _
  $region3: #{tpu_custom_call.1} parent=0 // loop_header
    %s10 = sphi 0, %s14
    %p11 = scmp.ge.s32.totalorder %s10, 4
    %s20 = sphi 0, %s22
    %s23 = sphi 0, %s20
    %s24 = sphi 0, %s23
    %s40 = sphi 0, %s24
    %s44 = sphi 0, %s44
    %s46 = sphi 0, %s44
    %s47 = sphi 0, %s46
    %s61 = sphi 0, %s47
    %s65 = sphi 0, %s65
    %s67 = sphi 0, %s65
    %s68 = sphi 0, %s67
    %s82 = sphi 0, %s68
    %s88 = sphi 0, %s90
    %s91 = sphi 0, %s88
    %s92 = sphi 0, %s91
    %s108 = sphi 0, %s92
    %s114 = sphi 0, %s116
    %s117 = sphi 0, %s114
    %s118 = sphi 0, %s117
    %s134 = sphi 0, %s118
  $region4: #{tpu_custom_call.1} parent=0 // loop_header_branch
    %13 = sbr.rel (%p11) target = $region8
  $region5: #{tpu_custom_call.1} parent=0 // loop_body
    %s15 = ssub.s32 %s10, 1
    %s16 = ssub.s32 %s10, 2
    %s17 = sadd.s32 %s10, 1
    %s18 = ssub.s32 %s10, %s17
    %p19 = scmp.eq.s32.totalorder %s18, 0
    %s21 = sadd.s32 %s20, 1
    %s22 = scalar_select %p19, %s20, %s21
    %p25 = pneg %p19
    %p26 = scmp.eq.s32.totalorder %s10, 1
    %p27 = por %p25, %p26
    %p28 = scmp.ne.s32.totalorder %s20, %s23
    %p29 = scmp.eq.s32.totalorder %s10, 0
    %p30 = por %p28, %p29
    %p31 = scmp.ne.s32.totalorder %s20, %s23
    %p32 = scmp.eq.s32.totalorder %s15, 1
    %p33 = por %p31, %p32
    %p34 = scmp.ne.s32.totalorder %s23, %s24
    %p35 = scmp.eq.s32.totalorder %s15, 0
    %p36 = por %p34, %p35
    %p37 = scmp.ne.s32.totalorder %s23, %s24
    %p38 = scmp.eq.s32.totalorder %s16, 1
    %p39 = por %p37, %p38
    %p41 = scmp.ne.s32.totalorder %s24, %s40
    %p42 = scmp.eq.s32.totalorder %s16, 0
    %p43 = por %p41, %p42
    %s45 = sadd.s32 %s44, 1
    %p48 = scmp.eq.s32.totalorder %s10, 1
    %p49 = scmp.ne.s32.totalorder %s44, %s46
    %p50 = scmp.eq.s32.totalorder %s10, 0
    %p51 = por %p49, %p50
    %p52 = scmp.ne.s32.totalorder %s44, %s46
    %p53 = scmp.eq.s32.totalorder %s15, 1
    %p54 = por %p52, %p53
    %p55 = scmp.ne.s32.totalorder %s46, %s47
    %p56 = scmp.eq.s32.totalorder %s15, 0
    %p57 = por %p55, %p56
    %p58 = scmp.ne.s32.totalorder %s46, %s47
    %p59 = scmp.eq.s32.totalorder %s16, 1
    %p60 = por %p58, %p59
    %p62 = scmp.ne.s32.totalorder %s47, %s61
    %p63 = scmp.eq.s32.totalorder %s16, 0
    %p64 = por %p62, %p63
    %s66 = sadd.s32 %s65, 1
    %p69 = scmp.eq.s32.totalorder %s10, 1
    %p70 = scmp.ne.s32.totalorder %s65, %s67
    %p71 = scmp.eq.s32.totalorder %s10, 0
    %p72 = por %p70, %p71
    %p73 = scmp.ne.s32.totalorder %s65, %s67
    %p74 = scmp.eq.s32.totalorder %s15, 1
    %p75 = por %p73, %p74
    %p76 = scmp.ne.s32.totalorder %s67, %s68
    %p77 = scmp.eq.s32.totalorder %s15, 0
    %p78 = por %p76, %p77
    %p79 = scmp.ne.s32.totalorder %s67, %s68
    %p80 = scmp.eq.s32.totalorder %s16, 1
    %p81 = por %p79, %p80
    %p83 = scmp.ne.s32.totalorder %s68, %s82
    %p84 = scmp.eq.s32.totalorder %s16, 0
    %p85 = por %p83, %p84
    %s86 = ssub.s32 %s10, %s17
    %p87 = scmp.eq.s32.totalorder %s86, 0
    %s89 = sadd.s32 %s88, 1
    %s90 = scalar_select %p87, %s88, %s89
    %p93 = pneg %p87
    %p94 = scmp.eq.s32.totalorder %s10, 1
    %p95 = por %p93, %p94
    %p96 = scmp.ne.s32.totalorder %s88, %s91
    %p97 = scmp.eq.s32.totalorder %s10, 0
    %p98 = por %p96, %p97
    %p99 = scmp.ne.s32.totalorder %s88, %s91
    %p100 = scmp.eq.s32.totalorder %s15, 1
    %p101 = por %p99, %p100
    %p102 = scmp.ne.s32.totalorder %s91, %s92
    %p103 = scmp.eq.s32.totalorder %s15, 0
    %p104 = por %p102, %p103
    %p105 = scmp.ne.s32.totalorder %s91, %s92
    %p106 = scmp.eq.s32.totalorder %s16, 1
    %p107 = por %p105, %p106
    %p109 = scmp.ne.s32.totalorder %s92, %s108
    %p110 = scmp.eq.s32.totalorder %s16, 0
    %p111 = por %p109, %p110
    %s112 = ssub.s32 %s10, %s17
    %p113 = scmp.eq.s32.totalorder %s112, 0
    %s115 = sadd.s32 %s114, 1
    %s116 = scalar_select %p113, %s114, %s115
    %p119 = pneg %p113
    %p120 = scmp.eq.s32.totalorder %s10, 1
    %p121 = por %p119, %p120
    %p122 = scmp.ne.s32.totalorder %s114, %s117
    %p123 = scmp.eq.s32.totalorder %s10, 0
    %p124 = por %p122, %p123
    %p125 = scmp.ne.s32.totalorder %s114, %s117
    %p126 = scmp.eq.s32.totalorder %s15, 1
    %p127 = por %p125, %p126
    %p128 = scmp.ne.s32.totalorder %s117, %s118
    %p129 = scmp.eq.s32.totalorder %s15, 0
    %p130 = por %p128, %p129
    %p131 = scmp.ne.s32.totalorder %s117, %s118
    %p132 = scmp.eq.s32.totalorder %s16, 1
    %p133 = por %p131, %p132
    %p135 = scmp.ne.s32.totalorder %s118, %s134
    %p136 = scmp.eq.s32.totalorder %s16, 0
    %p137 = por %p135, %p136
    %p138 = scmp.le.s32.totalorder 1, %s10
    %p139 = scmp.lt.s32.totalorder %s10, 3
    %p140 = pnand %p138, %p139
    %p141 = pneg %p140
    // Predicated region
    $region9: #{tpu_custom_call.1} parent=5 // pred_check
      _
    $region10: #{tpu_custom_call.1} parent=5 // pred_check_branch
      %143 = sbr.rel (%p140) target = $region12
    $region11: #{tpu_custom_call.1} parent=5 // pred_region
      %s144 = ssub.s32 %s10, 1
      // Predicated region
      $region13: #{tpu_custom_call.1} parent=11 // pred_check
        %p145 = pneg %p57
      $region14: #{tpu_custom_call.1} parent=11 // pred_check_branch
        %147 = sbr.rel (%p145) target = $region16
      $region15: #{tpu_custom_call.1} parent=11 // pred_region
        _
      $region16: #{tpu_custom_call.1} parent=11 // pred_fallthru
        _
      // Predicated region
      $region17: #{tpu_custom_call.1} parent=11 // pred_check
        %p148 = pneg %p78
      $region18: #{tpu_custom_call.1} parent=11 // pred_check_branch
        %150 = sbr.rel (%p148) target = $region20
      $region19: #{tpu_custom_call.1} parent=11 // pred_region
        _
      $region20: #{tpu_custom_call.1} parent=11 // pred_fallthru
        _
    $region12: #{tpu_custom_call.1} parent=5 // pred_fallthru
      _
    %p151 = scmp.lt.s32.totalorder %s10, 2
    // Predicated region
    $region21: #{tpu_custom_call.1} parent=5 // pred_check
      %p152 = pneg %p151
    $region22: #{tpu_custom_call.1} parent=5 // pred_check_branch
      %154 = sbr.rel (%p152) target = $region24
    $region23: #{tpu_custom_call.1} parent=5 // pred_region
      // Predicated region
      $region25: #{tpu_custom_call.1} parent=23 // pred_check
        %p155 = pneg %p30
      $region26: #{tpu_custom_call.1} parent=23 // pred_check_branch
        %157 = sbr.rel (%p155) target = $region28
      $region27: #{tpu_custom_call.1} parent=23 // pred_region
        %s158 = smul.u32 32, %s10
        %p159 = scmp.lt.s32.totalorder %s158, 63
        %s160 = scalar_select %p159, %s158, 63
        %s161 = smul.addr %s160, 4
        %s162 = scalar_lea.vmem %s0, %s161
        %s163 = smul.u32 32, %s10
      $region28: #{tpu_custom_call.1} parent=23 // pred_fallthru
        _
      // Predicated region
      $region29: #{tpu_custom_call.1} parent=23 // pred_check
        %p164 = pneg %p98
      $region30: #{tpu_custom_call.1} parent=23 // pred_check_branch
        %166 = sbr.rel (%p164) target = $region32
      $region31: #{tpu_custom_call.1} parent=23 // pred_region
        %s167 = smul.u32 32, %s10
        %p168 = scmp.lt.s32.totalorder %s167, 63
        %s169 = scalar_select %p168, %s167, 63
        %s170 = smul.addr %s169, 8
        %s171 = scalar_lea.vmem %s3, %s170
        %s172 = smul.u32 32, %s10
      $region32: #{tpu_custom_call.1} parent=23 // pred_fallthru
        _
    $region24: #{tpu_custom_call.1} parent=5 // pred_fallthru
      _
    %p173 = scmp.le.s32.totalorder 1, %s10
    %p174 = scmp.lt.s32.totalorder %s10, 3
    %p175 = pnand %p173, %p174
    %p176 = pneg %p175
    // Predicated region
    $region33: #{tpu_custom_call.1} parent=5 // pred_check
      _
    $region34: #{tpu_custom_call.1} parent=5 // pred_check_branch
      %178 = sbr.rel (%p175) target = $region36
    $region35: #{tpu_custom_call.1} parent=5 // pred_region
      %s179 = ssub.s32 %s10, 1
      %s180 = smul.u32 32, %s15
      %p181 = scmp.lt.s32.totalorder %s180, 63
      %s182 = scalar_select %p181, %s180, 63
      %s183 = smul.addr %s182, 4
      %s184 = scalar_lea.vmem %s0, %s183
      %p185 = pneg %p36
      %p186 = pneg %p33
      %p187 = pneg %p57
      %p188 = pneg %p54
      %p189 = pneg %p78
      %p190 = pneg %p75
      %s191 = smul.u32 32, %s15
      %p192 = scmp.lt.s32.totalorder %s191, 63
      %s193 = scalar_select %p192, %s191, 63
      %s194 = smul.addr %s193, 8
      %s195 = scalar_lea.vmem %s3, %s194
      %p196 = pneg %p104
      %p197 = pneg %p101
      %p198 = pneg %p130
      %p199 = pneg %p127
      %s200 = smul.u32 32, %s15
      %p201 = scmp.lt.s32.totalorder %s200, 63
      %s202 = scalar_select %p201, %s200, 63
      %s203 = smul.addr %s202, 4
      %s204 = scalar_lea.vmem %s4, %s203
      %s205 = smul.u32 32, %s15
      %p206 = scmp.lt.s32.totalorder %s205, 63
      %s207 = scalar_select %p206, %s205, 63
      %s208 = smul.addr %s207, 4
      %s209 = scalar_lea.vmem %s0, %s208
      %s210 = smul.u32 32, %s15
      %s211 = smul.u32 32, %s15
      %p212 = scmp.lt.s32.totalorder %s211, 63
      %s213 = scalar_select %p212, %s211, 63
      %s214 = smul.addr %s213, 8
      %s215 = scalar_lea.vmem %s3, %s214
      %s216 = smul.u32 32, %s15
      %s217 = smul.u32 32, %s15
      %p218 = scmp.lt.s32.totalorder %s217, 63
      %s219 = scalar_select %p218, %s217, 63
      %s220 = smul.addr %s219, 4
      %s221 = scalar_lea.vmem %s4, %s220
      %s222 = smul.u32 32, %s15
      %v224 = vld [vmem:[%s209] sm:$0xf]
      %v225 = vld [vmem:[%s209 + $0x4] sm:$0xf]
      %v226 = vld [vmem:[%s209 + $0x8] sm:$0xf]
      %v227 = vld [vmem:[%s209 + $0xc] sm:$0xf]
      %v228 = vld [vmem:[%s209 + $0x10] sm:$0xf]
      %v229 = vld [vmem:[%s209 + $0x14] sm:$0xf]
      %v230 = vld [vmem:[%s209 + $0x18] sm:$0xf]
      %v231 = vld [vmem:[%s209 + $0x1c] sm:$0xf]
      %v232 = vld [vmem:[%s209 + $0x20] sm:$0xf]
      %v233 = vld [vmem:[%s209 + $0x24] sm:$0xf]
      %v234 = vld [vmem:[%s209 + $0x28] sm:$0xf]
      %v235 = vld [vmem:[%s209 + $0x2c] sm:$0xf]
      %v236 = vld [vmem:[%s209 + $0x30] sm:$0xf]
      %v237 = vld [vmem:[%s209 + $0x34] sm:$0xf]
      %v238 = vld [vmem:[%s209 + $0x38] sm:$0xf]
      %v239 = vld [vmem:[%s209 + $0x3c] sm:$0xf]
      %v240 = vld [vmem:[%s209 + $0x40] sm:$0xf]
      %v241 = vld [vmem:[%s209 + $0x44] sm:$0xf]
      %v242 = vld [vmem:[%s209 + $0x48] sm:$0xf]
      %v243 = vld [vmem:[%s209 + $0x4c] sm:$0xf]
      %v244 = vld [vmem:[%s209 + $0x50] sm:$0xf]
      %v245 = vld [vmem:[%s209 + $0x54] sm:$0xf]
      %v246 = vld [vmem:[%s209 + $0x58] sm:$0xf]
      %v247 = vld [vmem:[%s209 + $0x5c] sm:$0xf]
      %v248 = vld [vmem:[%s209 + $0x60] sm:$0xf]
      %v249 = vld [vmem:[%s209 + $0x64] sm:$0xf]
      %v250 = vld [vmem:[%s209 + $0x68] sm:$0xf]
      %v251 = vld [vmem:[%s209 + $0x6c] sm:$0xf]
      %v252 = vld [vmem:[%s209 + $0x70] sm:$0xf]
      %v253 = vld [vmem:[%s209 + $0x74] sm:$0xf]
      %v254 = vld [vmem:[%s209 + $0x78] sm:$0xf]
      %v255 = vld [vmem:[%s209 + $0x7c] sm:$0xf]
      %v256 = vld [vmem:[%s1] sm:$0xf]
      %v257 = vld [vmem:[%s1 + $0x4] sm:$0xf]
      %v258 = vld [vmem:[%s1 + $0x8] sm:$0xf]
      %v259 = vld [vmem:[%s1 + $0xc] sm:$0xf]
      %v260 = vld [vmem:[%s1 + $0x10] sm:$0xf]
      %v261 = vld [vmem:[%s1 + $0x14] sm:$0xf]
      %v262 = vld [vmem:[%s1 + $0x18] sm:$0xf]
      %v263 = vld [vmem:[%s1 + $0x1c] sm:$0xf]
      %v264 = vld [vmem:[%s1 + $0x20] sm:$0xf]
      %v265 = vld [vmem:[%s1 + $0x24] sm:$0xf]
      %v266 = vld [vmem:[%s1 + $0x28] sm:$0xf]
      %v267 = vld [vmem:[%s1 + $0x2c] sm:$0xf]
      %v268 = vld [vmem:[%s1 + $0x30] sm:$0xf]
      %v269 = vld [vmem:[%s1 + $0x34] sm:$0xf]
      %v270 = vld [vmem:[%s1 + $0x38] sm:$0xf]
      %v271 = vld [vmem:[%s1 + $0x3c] sm:$0xf]
      %v272 = vld [vmem:[%s2] sm:$0x1]
      %v274 = vlaneseq
      %v275 = vshrl.u32 %v274, 7
      %v276 = vsub.s32 0, %v275
      %v277 = vrot.slane %v272, %v276
      %v311 = vunpack.c.l.b16 %v224
      %v312 = vunpack.c.l.b16 %v225
      %v313 = vunpack.c.l.b16 %v226
      %v314 = vunpack.c.l.b16 %v227
      %v315 = vunpack.c.l.b16 %v228
      %v316 = vunpack.c.l.b16 %v229
      %v317 = vunpack.c.l.b16 %v230
      %v318 = vunpack.c.l.b16 %v231
      %v319 = vunpack.c.l.b16 %v232
      %v320 = vunpack.c.l.b16 %v233
      %v321 = vunpack.c.l.b16 %v234
      %v322 = vunpack.c.l.b16 %v235
      %v323 = vunpack.c.l.b16 %v236
      %v324 = vunpack.c.l.b16 %v237
      %v325 = vunpack.c.l.b16 %v238
      %v326 = vunpack.c.l.b16 %v239
      %v327 = vunpack.c.l.b16 %v240
      %v328 = vunpack.c.l.b16 %v241
      %v329 = vunpack.c.l.b16 %v242
      %v330 = vunpack.c.l.b16 %v243
      %v331 = vunpack.c.l.b16 %v244
      %v332 = vunpack.c.l.b16 %v245
      %v333 = vunpack.c.l.b16 %v246
      %v334 = vunpack.c.l.b16 %v247
      %v335 = vunpack.c.l.b16 %v248
      %v336 = vunpack.c.l.b16 %v249
      %v337 = vunpack.c.l.b16 %v250
      %v338 = vunpack.c.l.b16 %v251
      %v339 = vunpack.c.l.b16 %v252
      %v340 = vunpack.c.l.b16 %v253
      %v341 = vunpack.c.l.b16 %v254
      %v342 = vunpack.c.l.b16 %v255
      %v343 = vpack.c.b16 %v312, %v311
      %v344 = vpack.c.b16 %v314, %v313
      %v345 = vpack.c.b16 %v316, %v315
      %v346 = vpack.c.b16 %v318, %v317
      %v347 = vpack.c.b16 %v320, %v319
      %v348 = vpack.c.b16 %v322, %v321
      %v349 = vpack.c.b16 %v324, %v323
      %v350 = vpack.c.b16 %v326, %v325
      %v351 = vpack.c.b16 %v328, %v327
      %v352 = vpack.c.b16 %v330, %v329
      %v353 = vpack.c.b16 %v332, %v331
      %v354 = vpack.c.b16 %v334, %v333
      %v355 = vpack.c.b16 %v336, %v335
      %v356 = vpack.c.b16 %v338, %v337
      %v357 = vpack.c.b16 %v340, %v339
      %v358 = vpack.c.b16 %v342, %v341
      %v391 = vunpack.c.l.b16 %v256
      %v392 = vunpack.c.l.b16 %v257
      %v393 = vunpack.c.l.b16 %v258
      %v394 = vunpack.c.l.b16 %v259
      %v395 = vunpack.c.l.b16 %v260
      %v396 = vunpack.c.l.b16 %v261
      %v397 = vunpack.c.l.b16 %v262
      %v398 = vunpack.c.l.b16 %v263
      %v399 = vunpack.c.l.b16 %v264
      %v400 = vunpack.c.l.b16 %v265
      %v401 = vunpack.c.l.b16 %v266
      %v402 = vunpack.c.l.b16 %v267
      %v403 = vunpack.c.l.b16 %v268
      %v404 = vunpack.c.l.b16 %v269
      %v405 = vunpack.c.l.b16 %v270
      %v406 = vunpack.c.l.b16 %v271
      %v407 = vpack.c.b16 %v392, %v391
      %v408 = vpack.c.b16 %v394, %v393
      %v409 = vpack.c.b16 %v396, %v395
      %v410 = vpack.c.b16 %v398, %v397
      %v411 = vpack.c.b16 %v400, %v399
      %v412 = vpack.c.b16 %v402, %v401
      %v413 = vpack.c.b16 %v404, %v403
      %v414 = vpack.c.b16 %v406, %v405
      %423 = vmatprep.subr.bf16.mxu0 0
      %424 = vmatpush1.bf16.msra.mxu0 %v407
      %425 = vmatprep.subr.bf16.mxu0 0
      %426 = vmatpush1.bf16.msra.mxu0 %v408
      %427 = vmatprep.subr.bf16.mxu0 0
      %428 = vmatpush1.bf16.msra.mxu0 %v409
      %429 = vmatprep.subr.bf16.mxu0 0
      %430 = vmatpush1.bf16.msra.mxu0 %v410
      %431 = vmatprep.subr.bf16.mxu0 0
      %432 = vmatpush1.bf16.msra.mxu0 %v411
      %433 = vmatprep.subr.bf16.mxu0 0
      %434 = vmatpush1.bf16.msra.mxu0 %v412
      %435 = vmatprep.subr.bf16.mxu0 0
      %436 = vmatpush1.bf16.msra.mxu0 %v413
      %437 = vmatprep.subr.bf16.mxu0 0
      %438 = vmatpush1.bf16.msra.mxu0 %v414
      %439 = vmatprep.subr.bf16.mxu0 0
      %440 = vmatpush1.bf16.msra.mxu0 0
      %441 = vmatprep.subr.bf16.mxu0 0
      %442 = vmatpush1.bf16.msra.mxu0 0
      %443 = vmatprep.subr.bf16.mxu0 0
      %444 = vmatpush1.bf16.msra.mxu0 0
      %445 = vmatprep.subr.bf16.mxu0 0
      %446 = vmatpush1.bf16.msra.mxu0 0
      %447 = vmatprep.subr.bf16.mxu0 0
      %448 = vmatpush1.bf16.msra.mxu0 0
      %449 = vmatprep.subr.bf16.mxu0 0
      %450 = vmatpush1.bf16.msra.mxu0 0
      %451 = vmatprep.subr.bf16.mxu0 0
      %452 = vmatpush1.bf16.msra.mxu0 0
      %453 = vmatprep.subr.bf16.mxu0 0
      %454 = vmatpush1.bf16.msra.mxu0 0
      %455 = vmatprep.mubr.bf16.mxu0 0
      %456 = vmatmul.mubr.bf16.gmra.mrb[0].mxu0 %v343
      %v457 = vpop.f32.mrb[0].mxu0
      %v458 = vadd.f32 %v277, %v457
      %v459 = vpop.f32.mrb[0].mxu0
      %v460 = vpop.f32.mrb[0].mxu0
      %v461 = vadd.f32 %v277, %v460
      %v462 = vpop.f32.mrb[0].mxu0
      %463 = vmatprep.mubr.bf16.mxu0 0
      %464 = vmatmul.mubr.bf16.gmra.mrb[0].mxu0 %v344
      %v465 = vpop.f32.mrb[0].mxu0
      %v466 = vadd.f32 %v277, %v465
      %v467 = vpop.f32.mrb[0].mxu0
      %v468 = vpop.f32.mrb[0].mxu0
      %v469 = vadd.f32 %v277, %v468
      %v470 = vpop.f32.mrb[0].mxu0
      %471 = vmatprep.mubr.bf16.mxu0 0
      %472 = vmatmul.mubr.bf16.gmra.mrb[0].mxu0 %v345
      %v473 = vpop.f32.mrb[0].mxu0
      %v474 = vadd.f32 %v277, %v473
      %v475 = vpop.f32.mrb[0].mxu0
      %v476 = vpop.f32.mrb[0].mxu0
      %v477 = vadd.f32 %v277, %v476
      %v478 = vpop.f32.mrb[0].mxu0
      %479 = vmatprep.mubr.bf16.mxu0 0
      %480 = vmatmul.mubr.bf16.gmra.mrb[0].mxu0 %v346
      %v481 = vpop.f32.mrb[0].mxu0
      %v482 = vadd.f32 %v277, %v481
      %v483 = vpop.f32.mrb[0].mxu0
      %v484 = vpop.f32.mrb[0].mxu0
      %v485 = vadd.f32 %v277, %v484
      %v486 = vpop.f32.mrb[0].mxu0
      %487 = vmatprep.mubr.bf16.mxu0 0
      %488 = vmatmul.mubr.bf16.gmra.mrb[0].mxu0 %v347
      %v489 = vpop.f32.mrb[0].mxu0
      %v490 = vadd.f32 %v277, %v489
      %v491 = vpop.f32.mrb[0].mxu0
      %v492 = vpop.f32.mrb[0].mxu0
      %v493 = vadd.f32 %v277, %v492
      %v494 = vpop.f32.mrb[0].mxu0
      %495 = vmatprep.mubr.bf16.mxu0 0
      %496 = vmatmul.mubr.bf16.gmra.mrb[0].mxu0 %v348
      %v497 = vpop.f32.mrb[0].mxu0
      %v498 = vadd.f32 %v277, %v497
      %v499 = vpop.f32.mrb[0].mxu0
      %v500 = vpop.f32.mrb[0].mxu0
      %v501 = vadd.f32 %v277, %v500
      %v502 = vpop.f32.mrb[0].mxu0
      %503 = vmatprep.mubr.bf16.mxu0 0
      %504 = vmatmul.mubr.bf16.gmra.mrb[0].mxu0 %v349
      %v505 = vpop.f32.mrb[0].mxu0
      %v506 = vadd.f32 %v277, %v505
      %v507 = vpop.f32.mrb[0].mxu0
      %v508 = vpop.f32.mrb[0].mxu0
      %v509 = vadd.f32 %v277, %v508
      %v510 = vpop.f32.mrb[0].mxu0
      %511 = vmatprep.mubr.bf16.mxu0 0
      %512 = vmatmul.mubr.bf16.gmra.mrb[0].mxu0 %v350
      %v513 = vpop.f32.mrb[0].mxu0
      %v514 = vadd.f32 %v277, %v513
      %v515 = vpop.f32.mrb[0].mxu0
      %v516 = vpop.f32.mrb[0].mxu0
      %v517 = vadd.f32 %v277, %v516
      %v518 = vpop.f32.mrb[0].mxu0
      %519 = vmatprep.mubr.bf16.mxu0 0
      %520 = vmatmul.mubr.bf16.gmra.mrb[0].mxu0 %v351
      %v521 = vpop.f32.mrb[0].mxu0
      %v522 = vadd.f32 %v277, %v521
      %v523 = vpop.f32.mrb[0].mxu0
      %v524 = vpop.f32.mrb[0].mxu0
      %v525 = vadd.f32 %v277, %v524
      %v526 = vpop.f32.mrb[0].mxu0
      %527 = vmatprep.mubr.bf16.mxu0 0
      %528 = vmatmul.mubr.bf16.gmra.mrb[0].mxu0 %v352
      %v529 = vpop.f32.mrb[0].mxu0
      %v530 = vadd.f32 %v277, %v529
      %v531 = vpop.f32.mrb[0].mxu0
      %v532 = vpop.f32.mrb[0].mxu0
      %v533 = vadd.f32 %v277, %v532
      %v534 = vpop.f32.mrb[0].mxu0
      %535 = vmatprep.mubr.bf16.mxu0 0
      %536 = vmatmul.mubr.bf16.gmra.mrb[0].mxu0 %v353
      %v537 = vpop.f32.mrb[0].mxu0
      %v538 = vadd.f32 %v277, %v537
      %v539 = vpop.f32.mrb[0].mxu0
      %v540 = vpop.f32.mrb[0].mxu0
      %v541 = vadd.f32 %v277, %v540
      %v542 = vpop.f32.mrb[0].mxu0
      %543 = vmatprep.mubr.bf16.mxu0 0
      %544 = vmatmul.mubr.bf16.gmra.mrb[0].mxu0 %v354
      %v545 = vpop.f32.mrb[0].mxu0
      %v546 = vadd.f32 %v277, %v545
      %v547 = vpop.f32.mrb[0].mxu0
      %v548 = vpop.f32.mrb[0].mxu0
      %v549 = vadd.f32 %v277, %v548
      %v550 = vpop.f32.mrb[0].mxu0
      %551 = vmatprep.mubr.bf16.mxu0 0
      %552 = vmatmul.mubr.bf16.gmra.mrb[0].mxu0 %v355
      %v553 = vpop.f32.mrb[0].mxu0
      %v554 = vadd.f32 %v277, %v553
      %v555 = vpop.f32.mrb[0].mxu0
      %v556 = vpop.f32.mrb[0].mxu0
      %v557 = vadd.f32 %v277, %v556
      %v558 = vpop.f32.mrb[0].mxu0
      %559 = vmatprep.mubr.bf16.mxu0 0
      %560 = vmatmul.mubr.bf16.gmra.mrb[0].mxu0 %v356
      %v561 = vpop.f32.mrb[0].mxu0
      %v562 = vadd.f32 %v277, %v561
      %v563 = vpop.f32.mrb[0].mxu0
      %v564 = vpop.f32.mrb[0].mxu0
      %v565 = vadd.f32 %v277, %v564
      %v566 = vpop.f32.mrb[0].mxu0
      %567 = vmatprep.mubr.bf16.mxu0 0
      %568 = vmatmul.mubr.bf16.gmra.mrb[0].mxu0 %v357
      %v569 = vpop.f32.mrb[0].mxu0
      %v570 = vadd.f32 %v277, %v569
      %v571 = vpop.f32.mrb[0].mxu0
      %v572 = vpop.f32.mrb[0].mxu0
      %v573 = vadd.f32 %v277, %v572
      %v574 = vpop.f32.mrb[0].mxu0
      %575 = vmatprep.mubr.bf16.mxu0 0
      %576 = vmatmul.mubr.bf16.gmra.mrb[0].mxu0 %v358
      %v577 = vpop.f32.mrb[0].mxu0
      %v578 = vadd.f32 %v277, %v577
      %v579 = vpop.f32.mrb[0].mxu0
      %v580 = vpop.f32.mrb[0].mxu0
      %v581 = vadd.f32 %v277, %v580
      %v582 = vpop.f32.mrb[0].mxu0
      %583 = vdwg.mxu0
      %v584 = vmax.f32 %v458, 0.0
      %v585 = vmax.f32 %v461, 0.0
      %v586 = vmax.f32 %v466, 0.0
      %v587 = vmax.f32 %v469, 0.0
      %v588 = vmax.f32 %v474, 0.0
      %v589 = vmax.f32 %v477, 0.0
      %v590 = vmax.f32 %v482, 0.0
      %v591 = vmax.f32 %v485, 0.0
      %v592 = vmax.f32 %v490, 0.0
      %v593 = vmax.f32 %v493, 0.0
      %v594 = vmax.f32 %v498, 0.0
      %v595 = vmax.f32 %v501, 0.0
      %v596 = vmax.f32 %v506, 0.0
      %v597 = vmax.f32 %v509, 0.0
      %v598 = vmax.f32 %v514, 0.0
      %v599 = vmax.f32 %v517, 0.0
      %v600 = vmax.f32 %v522, 0.0
      %v601 = vmax.f32 %v525, 0.0
      %v602 = vmax.f32 %v530, 0.0
      %v603 = vmax.f32 %v533, 0.0
      %v604 = vmax.f32 %v538, 0.0
      %v605 = vmax.f32 %v541, 0.0
      %v606 = vmax.f32 %v546, 0.0
      %v607 = vmax.f32 %v549, 0.0
      %v608 = vmax.f32 %v554, 0.0
      %v609 = vmax.f32 %v557, 0.0
      %v610 = vmax.f32 %v562, 0.0
      %v611 = vmax.f32 %v565, 0.0
      %v612 = vmax.f32 %v570, 0.0
      %v613 = vmax.f32 %v573, 0.0
      %v614 = vmax.f32 %v578, 0.0
      %v615 = vmax.f32 %v581, 0.0
      %v616 = vld [vmem:[%s215] sm:$0xff]
      %v617 = vld [vmem:[%s215 + $0x8] sm:$0xff]
      %v618 = vld [vmem:[%s215 + $0x10] sm:$0xff]
      %v619 = vld [vmem:[%s215 + $0x18] sm:$0xff]
      %v620 = vld [vmem:[%s215 + $0x20] sm:$0xff]
      %v621 = vld [vmem:[%s215 + $0x28] sm:$0xff]
      %v622 = vld [vmem:[%s215 + $0x30] sm:$0xff]
      %v623 = vld [vmem:[%s215 + $0x38] sm:$0xff]
      %v624 = vld [vmem:[%s215 + $0x40] sm:$0xff]
      %v625 = vld [vmem:[%s215 + $0x48] sm:$0xff]
      %v626 = vld [vmem:[%s215 + $0x50] sm:$0xff]
      %v627 = vld [vmem:[%s215 + $0x58] sm:$0xff]
      %v628 = vld [vmem:[%s215 + $0x60] sm:$0xff]
      %v629 = vld [vmem:[%s215 + $0x68] sm:$0xff]
      %v630 = vld [vmem:[%s215 + $0x70] sm:$0xff]
      %v631 = vld [vmem:[%s215 + $0x78] sm:$0xff]
      %v632 = vld [vmem:[%s215 + $0x80] sm:$0xff]
      %v633 = vld [vmem:[%s215 + $0x88] sm:$0xff]
      %v634 = vld [vmem:[%s215 + $0x90] sm:$0xff]
      %v635 = vld [vmem:[%s215 + $0x98] sm:$0xff]
      %v636 = vld [vmem:[%s215 + $0xa0] sm:$0xff]
      %v637 = vld [vmem:[%s215 + $0xa8] sm:$0xff]
      %v638 = vld [vmem:[%s215 + $0xb0] sm:$0xff]
      %v639 = vld [vmem:[%s215 + $0xb8] sm:$0xff]
      %v640 = vld [vmem:[%s215 + $0xc0] sm:$0xff]
      %v641 = vld [vmem:[%s215 + $0xc8] sm:$0xff]
      %v642 = vld [vmem:[%s215 + $0xd0] sm:$0xff]
      %v643 = vld [vmem:[%s215 + $0xd8] sm:$0xff]
      %v644 = vld [vmem:[%s215 + $0xe0] sm:$0xff]
      %v645 = vld [vmem:[%s215 + $0xe8] sm:$0xff]
      %v646 = vld [vmem:[%s215 + $0xf0] sm:$0xff]
      %v647 = vld [vmem:[%s215 + $0xf8] sm:$0xff]
      %649 = vset.pattern.permute.xlu0 0
      %650 = vperm.xlu0 %649, %v616
      %v651 = vpop.permute.xlu0 %650
      %654 = vset.pattern.permute.xlu0 0
      %655 = vperm.xlu0 %654, %v617
      %v656 = vpop.permute.xlu0 %655
      %659 = vset.pattern.permute.xlu0 0
      %660 = vperm.xlu0 %659, %v618
      %v661 = vpop.permute.xlu0 %660
      %664 = vset.pattern.permute.xlu0 0
      %665 = vperm.xlu0 %664, %v619
      %v666 = vpop.permute.xlu0 %665
      %669 = vset.pattern.permute.xlu0 0
      %670 = vperm.xlu0 %669, %v620
      %v671 = vpop.permute.xlu0 %670
      %674 = vset.pattern.permute.xlu0 0
      %675 = vperm.xlu0 %674, %v621
      %v676 = vpop.permute.xlu0 %675
      %679 = vset.pattern.permute.xlu0 0
      %680 = vperm.xlu0 %679, %v622
      %v681 = vpop.permute.xlu0 %680
      %684 = vset.pattern.permute.xlu0 0
      %685 = vperm.xlu0 %684, %v623
      %v686 = vpop.permute.xlu0 %685
      %689 = vset.pattern.permute.xlu0 0
      %690 = vperm.xlu0 %689, %v624
      %v691 = vpop.permute.xlu0 %690
      %694 = vset.pattern.permute.xlu0 0
      %695 = vperm.xlu0 %694, %v625
      %v696 = vpop.permute.xlu0 %695
      %699 = vset.pattern.permute.xlu0 0
      %700 = vperm.xlu0 %699, %v626
      %v701 = vpop.permute.xlu0 %700
      %704 = vset.pattern.permute.xlu0 0
      %705 = vperm.xlu0 %704, %v627
      %v706 = vpop.permute.xlu0 %705
      %709 = vset.pattern.permute.xlu0 0
      %710 = vperm.xlu0 %709, %v628
      %v711 = vpop.permute.xlu0 %710
      %714 = vset.pattern.permute.xlu0 0
      %715 = vperm.xlu0 %714, %v629
      %v716 = vpop.permute.xlu0 %715
      %719 = vset.pattern.permute.xlu0 0
      %720 = vperm.xlu0 %719, %v630
      %v721 = vpop.permute.xlu0 %720
      %724 = vset.pattern.permute.xlu0 0
      %725 = vperm.xlu0 %724, %v631
      %v726 = vpop.permute.xlu0 %725
      %729 = vset.pattern.permute.xlu0 0
      %730 = vperm.xlu0 %729, %v632
      %v731 = vpop.permute.xlu0 %730
      %734 = vset.pattern.permute.xlu0 0
      %735 = vperm.xlu0 %734, %v633
      %v736 = vpop.permute.xlu0 %735
      %739 = vset.pattern.permute.xlu0 0
      %740 = vperm.xlu0 %739, %v634
      %v741 = vpop.permute.xlu0 %740
      %744 = vset.pattern.permute.xlu0 0
      %745 = vperm.xlu0 %744, %v635
      %v746 = vpop.permute.xlu0 %745
      %749 = vset.pattern.permute.xlu0 0
      %750 = vperm.xlu0 %749, %v636
      %v751 = vpop.permute.xlu0 %750
      %754 = vset.pattern.permute.xlu0 0
      %755 = vperm.xlu0 %754, %v637
      %v756 = vpop.permute.xlu0 %755
      %759 = vset.pattern.permute.xlu0 0
      %760 = vperm.xlu0 %759, %v638
      %v761 = vpop.permute.xlu0 %760
      %764 = vset.pattern.permute.xlu0 0
      %765 = vperm.xlu0 %764, %v639
      %v766 = vpop.permute.xlu0 %765
      %769 = vset.pattern.permute.xlu0 0
      %770 = vperm.xlu0 %769, %v640
      %v771 = vpop.permute.xlu0 %770
      %774 = vset.pattern.permute.xlu0 0
      %775 = vperm.xlu0 %774, %v641
      %v776 = vpop.permute.xlu0 %775
      %779 = vset.pattern.permute.xlu0 0
      %780 = vperm.xlu0 %779, %v642
      %v781 = vpop.permute.xlu0 %780
      %784 = vset.pattern.permute.xlu0 0
      %785 = vperm.xlu0 %784, %v643
      %v786 = vpop.permute.xlu0 %785
      %789 = vset.pattern.permute.xlu0 0
      %790 = vperm.xlu0 %789, %v644
      %v791 = vpop.permute.xlu0 %790
      %794 = vset.pattern.permute.xlu0 0
      %795 = vperm.xlu0 %794, %v645
      %v796 = vpop.permute.xlu0 %795
      %799 = vset.pattern.permute.xlu0 0
      %800 = vperm.xlu0 %799, %v646
      %v801 = vpop.permute.xlu0 %800
      %804 = vset.pattern.permute.xlu0 0
      %805 = vperm.xlu0 %804, %v647
      %v806 = vpop.permute.xlu0 %805
      %v808 = vmul.f32 %v584, %v651
      %v809 = vmul.f32 %v585, %v656
      %v810 = vmul.f32 %v586, %v661
      %v811 = vmul.f32 %v587, %v666
      %v812 = vmul.f32 %v588, %v671
      %v813 = vmul.f32 %v589, %v676
      %v814 = vmul.f32 %v590, %v681
      %v815 = vmul.f32 %v591, %v686
      %v816 = vmul.f32 %v592, %v691
      %v817 = vmul.f32 %v593, %v696
      %v818 = vmul.f32 %v594, %v701
      %v819 = vmul.f32 %v595, %v706
      %v820 = vmul.f32 %v596, %v711
      %v821 = vmul.f32 %v597, %v716
      %v822 = vmul.f32 %v598, %v721
      %v823 = vmul.f32 %v599, %v726
      %v824 = vmul.f32 %v600, %v731
      %v825 = vmul.f32 %v601, %v736
      %v826 = vmul.f32 %v602, %v741
      %v827 = vmul.f32 %v603, %v746
      %v828 = vmul.f32 %v604, %v751
      %v829 = vmul.f32 %v605, %v756
      %v830 = vmul.f32 %v606, %v761
      %v831 = vmul.f32 %v607, %v766
      %v832 = vmul.f32 %v608, %v771
      %v833 = vmul.f32 %v609, %v776
      %v834 = vmul.f32 %v610, %v781
      %v835 = vmul.f32 %v611, %v786
      %v836 = vmul.f32 %v612, %v791
      %v837 = vmul.f32 %v613, %v796
      %v838 = vmul.f32 %v614, %v801
      %v839 = vmul.f32 %v615, %v806
      %v840 = vpack.c.bf16 %v809, %v808
      %v841 = vpack.c.bf16 %v811, %v810
      %v842 = vpack.c.bf16 %v813, %v812
      %v843 = vpack.c.bf16 %v815, %v814
      %v844 = vpack.c.bf16 %v817, %v816
      %v845 = vpack.c.bf16 %v819, %v818
      %v846 = vpack.c.bf16 %v821, %v820
      %v847 = vpack.c.bf16 %v823, %v822
      %v848 = vpack.c.bf16 %v825, %v824
      %v849 = vpack.c.bf16 %v827, %v826
      %v850 = vpack.c.bf16 %v829, %v828
      %v851 = vpack.c.bf16 %v831, %v830
      %v852 = vpack.c.bf16 %v833, %v832
      %v853 = vpack.c.bf16 %v835, %v834
      %v854 = vpack.c.bf16 %v837, %v836
      %v855 = vpack.c.bf16 %v839, %v838
      %v872 = vunpack.c.l.b16 %v840
      %v873 = vunpack.c.h.b16 %v840
      %v874 = vunpack.c.l.b16 %v841
      %v875 = vunpack.c.h.b16 %v841
      %v876 = vunpack.c.l.b16 %v842
      %v877 = vunpack.c.h.b16 %v842
      %v878 = vunpack.c.l.b16 %v843
      %v879 = vunpack.c.h.b16 %v843
      %v880 = vunpack.c.l.b16 %v844
      %v881 = vunpack.c.h.b16 %v844
      %v882 = vunpack.c.l.b16 %v845
      %v883 = vunpack.c.h.b16 %v845
      %v884 = vunpack.c.l.b16 %v846
      %v885 = vunpack.c.h.b16 %v846
      %v886 = vunpack.c.l.b16 %v847
      %v887 = vunpack.c.h.b16 %v847
      %v888 = vunpack.c.l.b16 %v848
      %v889 = vunpack.c.h.b16 %v848
      %v890 = vunpack.c.l.b16 %v849
      %v891 = vunpack.c.h.b16 %v849
      %v892 = vunpack.c.l.b16 %v850
      %v893 = vunpack.c.h.b16 %v850
      %v894 = vunpack.c.l.b16 %v851
      %v895 = vunpack.c.h.b16 %v851
      %v896 = vunpack.c.l.b16 %v852
      %v897 = vunpack.c.h.b16 %v852
      %v898 = vunpack.c.l.b16 %v853
      %v899 = vunpack.c.h.b16 %v853
      %v900 = vunpack.c.l.b16 %v854
      %v901 = vunpack.c.h.b16 %v854
      %v902 = vunpack.c.l.b16 %v855
      %v903 = vunpack.c.h.b16 %v855
      %v904 = vpack.c.b16 %v872, %v872
      %v905 = vpack.c.b16 %v873, %v873
      %v906 = vpack.c.b16 %v874, %v874
      %v907 = vpack.c.b16 %v875, %v875
      %v908 = vpack.c.b16 %v876, %v876
      %v909 = vpack.c.b16 %v877, %v877
      %v910 = vpack.c.b16 %v878, %v878
      %v911 = vpack.c.b16 %v879, %v879
      %v912 = vpack.c.b16 %v880, %v880
      %v913 = vpack.c.b16 %v881, %v881
      %v914 = vpack.c.b16 %v882, %v882
      %v915 = vpack.c.b16 %v883, %v883
      %v916 = vpack.c.b16 %v884, %v884
      %v917 = vpack.c.b16 %v885, %v885
      %v918 = vpack.c.b16 %v886, %v886
      %v919 = vpack.c.b16 %v887, %v887
      %v920 = vpack.c.b16 %v888, %v888
      %v921 = vpack.c.b16 %v889, %v889
      %v922 = vpack.c.b16 %v890, %v890
      %v923 = vpack.c.b16 %v891, %v891
      %v924 = vpack.c.b16 %v892, %v892
      %v925 = vpack.c.b16 %v893, %v893
      %v926 = vpack.c.b16 %v894, %v894
      %v927 = vpack.c.b16 %v895, %v895
      %v928 = vpack.c.b16 %v896, %v896
      %v929 = vpack.c.b16 %v897, %v897
      %v930 = vpack.c.b16 %v898, %v898
      %v931 = vpack.c.b16 %v899, %v899
      %v932 = vpack.c.b16 %v900, %v900
      %v933 = vpack.c.b16 %v901, %v901
      %v934 = vpack.c.b16 %v902, %v902
      %v935 = vpack.c.b16 %v903, %v903
      %vm968 = vcmask 125952
      %969 = vst.msk [vmem:[%s221] sm:$0xf] %vm968, %v904
      %970 = vst.msk [vmem:[%s221 + $0x4] sm:$0xf] %vm968, %v905
      %971 = vst.msk [vmem:[%s221 + $0x8] sm:$0xf] %vm968, %v906
      %972 = vst.msk [vmem:[%s221 + $0xc] sm:$0xf] %vm968, %v907
      %973 = vst.msk [vmem:[%s221 + $0x10] sm:$0xf] %vm968, %v908
      %974 = vst.msk [vmem:[%s221 + $0x14] sm:$0xf] %vm968, %v909
      %975 = vst.msk [vmem:[%s221 + $0x18] sm:$0xf] %vm968, %v910
      %976 = vst.msk [vmem:[%s221 + $0x1c] sm:$0xf] %vm968, %v911
      %977 = vst.msk [vmem:[%s221 + $0x20] sm:$0xf] %vm968, %v912
      %978 = vst.msk [vmem:[%s221 + $0x24] sm:$0xf] %vm968, %v913
      %979 = vst.msk [vmem:[%s221 + $0x28] sm:$0xf] %vm968, %v914
      %980 = vst.msk [vmem:[%s221 + $0x2c] sm:$0xf] %vm968, %v915
      %981 = vst.msk [vmem:[%s221 + $0x30] sm:$0xf] %vm968, %v916
      %982 = vst.msk [vmem:[%s221 + $0x34] sm:$0xf] %vm968, %v917
      %983 = vst.msk [vmem:[%s221 + $0x38] sm:$0xf] %vm968, %v918
      %984 = vst.msk [vmem:[%s221 + $0x3c] sm:$0xf] %vm968, %v919
      %985 = vst.msk [vmem:[%s221 + $0x40] sm:$0xf] %vm968, %v920
      %986 = vst.msk [vmem:[%s221 + $0x44] sm:$0xf] %vm968, %v921
      %987 = vst.msk [vmem:[%s221 + $0x48] sm:$0xf] %vm968, %v922
      %988 = vst.msk [vmem:[%s221 + $0x4c] sm:$0xf] %vm968, %v923
      %989 = vst.msk [vmem:[%s221 + $0x50] sm:$0xf] %vm968, %v924
      %990 = vst.msk [vmem:[%s221 + $0x54] sm:$0xf] %vm968, %v925
      %991 = vst.msk [vmem:[%s221 + $0x58] sm:$0xf] %vm968, %v926
      %992 = vst.msk [vmem:[%s221 + $0x5c] sm:$0xf] %vm968, %v927
      %993 = vst.msk [vmem:[%s221 + $0x60] sm:$0xf] %vm968, %v928
      %994 = vst.msk [vmem:[%s221 + $0x64] sm:$0xf] %vm968, %v929
      %995 = vst.msk [vmem:[%s221 + $0x68] sm:$0xf] %vm968, %v930
      %996 = vst.msk [vmem:[%s221 + $0x6c] sm:$0xf] %vm968, %v931
      %997 = vst.msk [vmem:[%s221 + $0x70] sm:$0xf] %vm968, %v932
      %998 = vst.msk [vmem:[%s221 + $0x74] sm:$0xf] %vm968, %v933
      %999 = vst.msk [vmem:[%s221 + $0x78] sm:$0xf] %vm968, %v934
      %1000 = vst.msk [vmem:[%s221 + $0x7c] sm:$0xf] %vm968, %v935
      %s1001 = smul.u32 32, %s15
      %p1002 = scmp.lt.s32.totalorder %s1001, 63
      %s1003 = scalar_select %p1002, %s1001, 63
      %s1004 = smul.addr %s1003, 4
      %s1005 = scalar_lea.vmem %s4, %s1004
      // Predicated region
      $region37: #{tpu_custom_call.1} parent=35 // pred_check
        %p1006 = pneg %p127
      $region38: #{tpu_custom_call.1} parent=35 // pred_check_branch
        %1008 = sbr.rel (%p1006) target = $region40
      $region39: #{tpu_custom_call.1} parent=35 // pred_region
        %s1009 = smul.u32 32, %s15
      $region40: #{tpu_custom_call.1} parent=35 // pred_fallthru
        _
    $region36: #{tpu_custom_call.1} parent=5 // pred_fallthru
      _
    %p1010 = scmp.le.s32.totalorder 2, %s10
    // Predicated region
    $region41: #{tpu_custom_call.1} parent=5 // pred_check
      %p1011 = pneg %p1010
    $region42: #{tpu_custom_call.1} parent=5 // pred_check_branch
      %1013 = sbr.rel (%p1011) target = $region44
    $region43: #{tpu_custom_call.1} parent=5 // pred_region
      %s1014 = ssub.s32 %s10, 2
      // Predicated region
      $region45: #{tpu_custom_call.1} parent=43 // pred_check
        %p1015 = pneg %p133
      $region46: #{tpu_custom_call.1} parent=43 // pred_check_branch
        %1017 = sbr.rel (%p1015) target = $region48
      $region47: #{tpu_custom_call.1} parent=43 // pred_region
        %s1018 = smul.u32 32, %s16
        %p1019 = scmp.lt.s32.totalorder %s1018, 63
        %s1020 = scalar_select %p1019, %s1018, 63
        %s1021 = smul.addr %s1020, 4
        %s1022 = scalar_lea.vmem %s4, %s1021
      $region48: #{tpu_custom_call.1} parent=43 // pred_fallthru
        _
    $region44: #{tpu_custom_call.1} parent=5 // pred_fallthru
      _
  $region6: #{tpu_custom_call.1} parent=0 // loop_footer
    %s14 = sadd.s32 1, %s10
  $region7: #{tpu_custom_call.1} parent=0 // loop_footer_branch
    %9 = sbr.rel target = $region3
  $region8: #{tpu_custom_call.1} parent=0 // loop_exit
    _

</llo_original>
